<compile_context>
chip_gen: v7x
topology: tpu7x:2x2x1
jax: 0.10.0
libtpu: 0.0.40
codegen_flags: <defaults>
</compile_context>

<pallas_src>
import functools

import jax
import jax.numpy as jnp
from jax.experimental import pallas as pl
from jax.experimental.pallas import tpu as pltpu

DOWN_DIM = 256
HID_DIM = DOWN_DIM // 2
BN_EPS = 0.8     # nn.BatchNorm1d(down_dim, 0.8) -> eps = 0.8
LEAK = 0.2       # LeakyReLU(0.2)

_FUSED_MAX_X_BYTES = 1 << 20      # single-call fast path while x fits easily in VMEM
_TILE_CANDIDATES = (1024, 512, 256, 128, 64, 32, 16, 8)


def _pick_tile(batch, max_tile=None):
    cands = (_TILE_CANDIDATES if max_tile is None
             else tuple(t for t in _TILE_CANDIDATES if t <= max_tile))
    for t in cands:
        if batch % t == 0:
            return t
    return batch  # fall back to a single whole-batch block


def _leaky(x):
    return jnp.where(x > 0, x, LEAK * x)


def _bn_whole_batch(x, gamma, beta):
    """Training-mode BN when the full batch is resident (stable two-pass)."""
    m = jnp.mean(x, axis=0, keepdims=True)
    xc = x - m
    v = jnp.mean(xc * xc, axis=0, keepdims=True)
    return xc * (gamma * jax.lax.rsqrt(v + BN_EPS)) + beta


def _bn_scale_shift_from_moments(s, ss, n, gamma, beta):
    mean = s / n
    var = ss / n - mean * mean              # biased batch variance
    scale = gamma * jax.lax.rsqrt(var + BN_EPS)
    shift = beta - mean * scale
    return scale, shift


# ---------------------------------------------------------------------------
# Fused single-call kernels (whole batch in VMEM)
# ---------------------------------------------------------------------------
def _mbi_fused_kernel(x_ref, g1_ref, b1_ref, w1_ref, c1_ref,
                      g2_ref, b2_ref, w2_ref, c2_ref, o_ref):
    x = x_ref[...].astype(jnp.float32)
    h = _leaky(_bn_whole_batch(x, g1_ref[...], b1_ref[...]))
    h = jnp.dot(h, w1_ref[...], preferred_element_type=jnp.float32) + c1_ref[...]
    h = _leaky(_bn_whole_batch(h, g2_ref[...], b2_ref[...]))
    z = jnp.sum(h * w2_ref[...], axis=-1, keepdims=True) + c2_ref[...]
    o_ref[...] = jax.nn.sigmoid(z)


def _bi_fused_kernel(x_ref, w1_ref, c1_ref, g1_ref, b1_ref,
                     w2_ref, c2_ref, o_ref):
    x = x_ref[...].astype(jnp.float32)
    h = jnp.dot(x, w1_ref[...], preferred_element_type=jnp.float32) + c1_ref[...]
    h = _leaky(_bn_whole_batch(h, g1_ref[...], b1_ref[...]))
    o_ref[...] = jnp.sum(h * w2_ref[...], axis=-1, keepdims=True) + c2_ref[...]


def _uni_fused_kernel(x_ref, g1_ref, b1_ref, w1_ref, c1_ref, o_ref):
    x = x_ref[...].astype(jnp.float32)
    h = _leaky(_bn_whole_batch(x, g1_ref[...], b1_ref[...]))
    z = jnp.sum(h * w1_ref[...], axis=-1, keepdims=True) + c1_ref[...]
    o_ref[...] = jax.nn.sigmoid(z)


# ---------------------------------------------------------------------------
# Tiled-path kernels
# ---------------------------------------------------------------------------
def _stats_kernel(x_ref, s_ref, ss_ref):
    """One-pass per-feature sum / sum-of-squares accumulated over batch tiles."""
    @pl.when(pl.program_id(0) == 0)
    def _():
        s_ref[...] = jnp.zeros_like(s_ref)
        ss_ref[...] = jnp.zeros_like(ss_ref)

    x = x_ref[...].astype(jnp.float32)
    s_ref[...] += jnp.sum(x, axis=0, keepdims=True)
    ss_ref[...] += jnp.sum(x * x, axis=0, keepdims=True)


def _hidden_bn_stats_kernel(x_ref, scale_ref, shift_ref, w_ref, b_ref,
                            h_ref, s_ref, ss_ref):
    """h = LReLU(x*scale+shift) @ W + b, plus per-feature sum/sumsq of h."""
    @pl.when(pl.program_id(0) == 0)
    def _():
        s_ref[...] = jnp.zeros_like(s_ref)
        ss_ref[...] = jnp.zeros_like(ss_ref)

    x = x_ref[...].astype(jnp.float32)
    xn = _leaky(x * scale_ref[...] + shift_ref[...])
    h = jnp.dot(xn, w_ref[...], preferred_element_type=jnp.float32) + b_ref[...]
    h_ref[...] = h
    s_ref[...] += jnp.sum(h, axis=0, keepdims=True)
    ss_ref[...] += jnp.sum(h * h, axis=0, keepdims=True)


def _hidden_plain_stats_kernel(x_ref, w_ref, b_ref, h_ref, s_ref, ss_ref):
    """h = x @ W + b, plus per-feature sum/sumsq of h."""
    @pl.when(pl.program_id(0) == 0)
    def _():
        s_ref[...] = jnp.zeros_like(s_ref)
        ss_ref[...] = jnp.zeros_like(ss_ref)

    x = x_ref[...].astype(jnp.float32)
    h = jnp.dot(x, w_ref[...], preferred_element_type=jnp.float32) + b_ref[...]
    h_ref[...] = h
    s_ref[...] += jnp.sum(h, axis=0, keepdims=True)
    ss_ref[...] += jnp.sum(h * h, axis=0, keepdims=True)


def _head_kernel(x_ref, scale_ref, shift_ref, w_ref, b_ref, o_ref, *,
                 use_sigmoid):
    """out = [sigmoid](sum(LReLU(x*scale+shift) * w_row, -1) + b)."""
    x = x_ref[...].astype(jnp.float32)
    xn = _leaky(x * scale_ref[...] + shift_ref[...])
    z = jnp.sum(xn * w_ref[...], axis=-1, keepdims=True) + b_ref[...]
    if use_sigmoid:
        z = jax.nn.sigmoid(z)
    o_ref[...] = z


# ---------------------------------------------------------------------------
# pallas_call wrappers
# ---------------------------------------------------------------------------
def _const_spec(shape):
    # Constant block index -> parameter stays resident in VMEM across the grid.
    return pl.BlockSpec(shape, lambda i: (0,) * len(shape))


def _fused_call(kernel, x, param_args):
    batch, _ = x.shape

    def full_spec(a):
        shp = a.shape
        return pl.BlockSpec(shp, lambda i: (0,) * len(shp))

    return pl.pallas_call(
        kernel,
        out_shape=jax.ShapeDtypeStruct((batch, 1), jnp.float32),
        grid=(1,),
        in_specs=[full_spec(x)] + [full_spec(a) for a in param_args],
        out_specs=pl.BlockSpec((batch, 1), lambda i: (0, 0)),
        compiler_params=pltpu.CompilerParams(
            dimension_semantics=("arbitrary",)),
    )(x, *param_args)


def _stats(x, tb=None):
    batch, d = x.shape
    tb = _pick_tile(batch, tb)
    nb = batch // tb
    return pl.pallas_call(
        _stats_kernel,
        out_shape=(jax.ShapeDtypeStruct((1, d), jnp.float32),
                   jax.ShapeDtypeStruct((1, d), jnp.float32)),
        grid=(nb,),
        in_specs=[pl.BlockSpec((tb, d), lambda i: (i, 0))],
        out_specs=(_const_spec((1, d)), _const_spec((1, d))),
        compiler_params=pltpu.CompilerParams(
            dimension_semantics=("arbitrary",)),
        cost_estimate=pl.CostEstimate(
            flops=3 * batch * d, transcendentals=0,
            bytes_accessed=4 * (batch * d + 2 * d)),
    )(x)


def _bn_scale_shift(x, gamma, beta, tb=None):
    s, ss = _stats(x, tb)
    return _bn_scale_shift_from_moments(s, ss, x.shape[0], gamma, beta)


def _hidden_with_stats(x, w, b, scale=None, shift=None, tb=None):
    """Returns (h, sum(h, 0), sum(h*h, 0)) in one batch-tiled pallas_call."""
    batch, din = x.shape
    dh = w.shape[1]
    tb = _pick_tile(batch, tb)
    nb = batch // tb
    if scale is not None:
        kernel = _hidden_bn_stats_kernel
        args = (x, scale, shift, w, b)
        in_specs = [pl.BlockSpec((tb, din), lambda i: (i, 0)),
                    _const_spec((1, din)), _const_spec((1, din)),
                    _const_spec((din, dh)), _const_spec((1, dh))]
    else:
        kernel = _hidden_plain_stats_kernel
        args = (x, w, b)
        in_specs = [pl.BlockSpec((tb, din), lambda i: (i, 0)),
                    _const_spec((din, dh)), _const_spec((1, dh))]
    return pl.pallas_call(
        kernel,
        out_shape=(jax.ShapeDtypeStruct((batch, dh), jnp.float32),
                   jax.ShapeDtypeStruct((1, dh), jnp.float32),
                   jax.ShapeDtypeStruct((1, dh), jnp.float32)),
        grid=(nb,),
        in_specs=in_specs,
        out_specs=(pl.BlockSpec((tb, dh), lambda i: (i, 0)),
                   _const_spec((1, dh)), _const_spec((1, dh))),
        compiler_params=pltpu.CompilerParams(
            dimension_semantics=("arbitrary",)),
        cost_estimate=pl.CostEstimate(
            flops=2 * batch * din * dh + 4 * batch * din + 5 * batch * dh,
            transcendentals=0,
            bytes_accessed=4 * (batch * din + batch * dh + din * dh
                                + 3 * din + 3 * dh)),
    )(*args)


def _head(x, scale, shift, w_row, c, use_sigmoid, tb=None):
    batch, d = x.shape
    tb = _pick_tile(batch, tb)
    nb = batch // tb
    kernel = functools.partial(_head_kernel, use_sigmoid=use_sigmoid)
    return pl.pallas_call(
        kernel,
        out_shape=jax.ShapeDtypeStruct((batch, 1), jnp.float32),
        grid=(nb,),
        in_specs=[pl.BlockSpec((tb, d), lambda i: (i, 0)),
                  _const_spec((1, d)), _const_spec((1, d)),
                  _const_spec((1, d)), _const_spec((1, 1))],
        out_specs=pl.BlockSpec((tb, 1), lambda i: (i, 0)),
        compiler_params=pltpu.CompilerParams(
            dimension_semantics=("parallel",)),
        cost_estimate=pl.CostEstimate(
            flops=5 * batch * d,
            transcendentals=batch if use_sigmoid else 0,
            bytes_accessed=4 * (batch * d + 3 * d + batch + 1)),
    )(x, scale, shift, w_row, c)


# ---------------------------------------------------------------------------
# Parameters & forward
# ---------------------------------------------------------------------------
def init_params(key):
    d, h = DOWN_DIM, HID_DIM
    ks = jax.random.split(key, 5)

    def lin(k, fan_in, fan_out):
        bound = 1.0 / float(fan_in) ** 0.5
        kw, kb = jax.random.split(k)
        w = jax.random.uniform(kw, (fan_in, fan_out), jnp.float32, -bound, bound)
        b = jax.random.uniform(kb, (1, fan_out), jnp.float32, -bound, bound)
        return w, b

    p = {}
    # fc_3 (MBI): BN(256) -> LReLU -> Linear(256,128) -> BN(128) -> LReLU
    #             -> Linear(128,1) -> Sigmoid
    p["fc3_g1"], p["fc3_b1"] = jnp.ones((1, d)), jnp.zeros((1, d))
    p["fc3_w1"], p["fc3_c1"] = lin(ks[0], d, h)
    p["fc3_g2"], p["fc3_b2"] = jnp.ones((1, h)), jnp.zeros((1, h))
    w2, c2 = lin(ks[1], h, 1)
    p["fc3_w2_row"], p["fc3_c2"] = w2.T, c2          # (1, h) row, (1, 1)
    # fc_2 (BI): Linear(256,128) -> BN(128) -> LReLU -> Linear(128,1)
    p["fc2_w1"], p["fc2_c1"] = lin(ks[2], d, h)
    p["fc2_g1"], p["fc2_b1"] = jnp.ones((1, h)), jnp.zeros((1, h))
    w2b, c2b = lin(ks[3], h, 1)
    p["fc2_w2_row"], p["fc2_c2"] = w2b.T, c2b
    # fc (UNI): BN(256) -> LReLU -> Linear(256,1) -> Sigmoid
    p["fc_g1"], p["fc_b1"] = jnp.ones((1, d)), jnp.zeros((1, d))
    w1u, c1u = lin(ks[4], d, 1)
    p["fc_w1_row"], p["fc_c1"] = w1u.T, c1u
    return p


def discriminator_forward(data, params, dis_layer="MBI", tile=None):
    x = data
    batch, d = x.shape
    fused = (tile is None) and (batch * d * 4 <= _FUSED_MAX_X_BYTES)

    if dis_layer == "UNI":
        if fused:
            return _fused_call(
                _uni_fused_kernel, x,
                (params["fc_g1"], params["fc_b1"],
                 params["fc_w1_row"], params["fc_c1"]))
        sc, sh = _bn_scale_shift(x, params["fc_g1"], params["fc_b1"], tile)
        return _head(x, sc, sh, params["fc_w1_row"], params["fc_c1"],
                     use_sigmoid=True, tb=tile)

    if dis_layer == "BI":
        if fused:
            return _fused_call(
                _bi_fused_kernel, x,
                (params["fc2_w1"], params["fc2_c1"],
                 params["fc2_g1"], params["fc2_b1"],
                 params["fc2_w2_row"], params["fc2_c2"]))
        h, s, ss = _hidden_with_stats(x, params["fc2_w1"], params["fc2_c1"],
                                      tb=tile)
        sc, sh = _bn_scale_shift_from_moments(
            s, ss, batch, params["fc2_g1"], params["fc2_b1"])
        return _head(h, sc, sh, params["fc2_w2_row"], params["fc2_c2"],
                     use_sigmoid=False, tb=tile)

    if dis_layer == "MBI":
        if fused:
            return _fused_call(
                _mbi_fused_kernel, x,
                (params["fc3_g1"], params["fc3_b1"],
                 params["fc3_w1"], params["fc3_c1"],
                 params["fc3_g2"], params["fc3_b2"],
                 params["fc3_w2_row"], params["fc3_c2"]))
        sc1, sh1 = _bn_scale_shift(x, params["fc3_g1"], params["fc3_b1"], tile)
        h, s, ss = _hidden_with_stats(x, params["fc3_w1"], params["fc3_c1"],
                                      sc1, sh1, tb=tile)
        sc2, sh2 = _bn_scale_shift_from_moments(
            s, ss, batch, params["fc3_g2"], params["fc3_b2"])
        return _head(h, sc2, sh2, params["fc3_w2_row"], params["fc3_c2"],
                     use_sigmoid=True, tb=tile)

    raise ValueError(f"unknown dis_layer {dis_layer!r}")


# ---------------------------------------------------------------------------
# Pure-JAX reference (correctness check only)
# ---------------------------------------------------------------------------
def _ref_forward(data, p, dis_layer):
    x = data.astype(jnp.float32)
    hp = jax.lax.Precision.HIGHEST

    def bn(v, g, b):
        m = jnp.mean(v, axis=0, keepdims=True)
        var = jnp.var(v, axis=0, keepdims=True)
        return (v - m) * jax.lax.rsqrt(var + BN_EPS) * g + b

    if dis_layer == "UNI":
        h = _leaky(bn(x, p["fc_g1"], p["fc_b1"]))
        return jax.nn.sigmoid(
            jnp.dot(h, p["fc_w1_row"].T, precision=hp) + p["fc_c1"])
    if dis_layer == "BI":
        h = jnp.dot(x, p["fc2_w1"], precision=hp) + p["fc2_c1"]
        h = _leaky(bn(h, p["fc2_g1"], p["fc2_b1"]))
        return jnp.dot(h, p["fc2_w2_row"].T, precision=hp) + p["fc2_c2"]
    # MBI
    h = _leaky(bn(x, p["fc3_g1"], p["fc3_b1"]))
    h = jnp.dot(h, p["fc3_w1"], precision=hp) + p["fc3_c1"]
    h = _leaky(bn(h, p["fc3_g2"], p["fc3_b2"]))
    return jax.nn.sigmoid(
        jnp.dot(h, p["fc3_w2_row"].T, precision=hp) + p["fc3_c2"])


if __name__ == "__main__":
    key = jax.random.PRNGKey(0)
    k_data, k_params = jax.random.split(key)
    params = init_params(k_params)

    # Fast fused path (whole batch in VMEM, one pallas_call per branch).
    batch = 16
    data = jax.random.normal(k_data, (batch, DOWN_DIM), jnp.float32)
    for layer in ("MBI", "BI", "UNI"):
        out = jax.block_until_ready(discriminator_forward(data, params, layer))
        ref = _ref_forward(data, params, layer)
        assert out.shape == (batch, 1), (layer, out.shape)
        assert jnp.allclose(out, ref, atol=1e-4, rtol=1e-4), (layer, out, ref)

    # Tiled path: stats accumulation across batch tiles + fused hidden/stats
    # kernel + batch-parallel head.
    batch2 = 32
    data2 = jax.random.normal(jax.random.PRNGKey(1), (batch2, DOWN_DIM),
                              jnp.float32)
    for layer in ("MBI", "BI", "UNI"):
        out2 = jax.block_until_ready(
            discriminator_forward(data2, params, layer, tile=8))
        ref2 = _ref_forward(data2, params, layer)
        assert out2.shape == (batch2, 1), (layer, out2.shape)
        assert jnp.allclose(out2, ref2, atol=1e-4, rtol=1e-4), (layer, out2, ref2)

    print("KERNEL_OK")
</pallas_src>

<mosaic_0001>
module attributes {stable_mosaic.version = 11 : i64} {
  func.func @_mbi_fused_kernel(%arg0: i32, %arg1: memref<16x256xf32, #tpu.memory_space<vmem>>, %arg2: memref<1x256xf32, #tpu.memory_space<vmem>>, %arg3: memref<1x256xf32, #tpu.memory_space<vmem>>, %arg4: memref<256x128xf32, #tpu.memory_space<vmem>>, %arg5: memref<1x128xf32, #tpu.memory_space<vmem>>, %arg6: memref<1x128xf32, #tpu.memory_space<vmem>>, %arg7: memref<1x128xf32, #tpu.memory_space<vmem>>, %arg8: memref<1x128xf32, #tpu.memory_space<vmem>>, %arg9: memref<1x1xf32, #tpu.memory_space<vmem>>, %arg10: memref<16x1xf32, #tpu.memory_space<vmem>>) attributes {dimension_semantics = [#tpu.dimension_semantics<arbitrary>], iteration_bounds = array<i64: 1>, scalar_prefetch = 0 : i64, scratch_operands = 0 : i64, tpu.core_type = #tpu.core_type<tc>, window_params = [{pipeline_mode = #tpu.pipeline_mode<synchronous>, transform_indices = @transform_0, window_bounds = array<i64: 16, 256>}, {pipeline_mode = #tpu.pipeline_mode<synchronous>, transform_indices = @transform_1, window_bounds = array<i64: 1, 256>}, {pipeline_mode = #tpu.pipeline_mode<synchronous>, transform_indices = @transform_2, window_bounds = array<i64: 1, 256>}, {pipeline_mode = #tpu.pipeline_mode<synchronous>, transform_indices = @transform_3, window_bounds = array<i64: 256, 128>}, {pipeline_mode = #tpu.pipeline_mode<synchronous>, transform_indices = @transform_4, window_bounds = array<i64: 1, 128>}, {pipeline_mode = #tpu.pipeline_mode<synchronous>, transform_indices = @transform_5, window_bounds = array<i64: 1, 128>}, {pipeline_mode = #tpu.pipeline_mode<synchronous>, transform_indices = @transform_6, window_bounds = array<i64: 1, 128>}, {pipeline_mode = #tpu.pipeline_mode<synchronous>, transform_indices = @transform_7, window_bounds = array<i64: 1, 128>}, {pipeline_mode = #tpu.pipeline_mode<synchronous>, transform_indices = @transform_8, window_bounds = array<i64: 1, 1>}, {pipeline_mode = #tpu.pipeline_mode<synchronous>, transform_indices = @transform_9, window_bounds = array<i64: 16, 1>}]} {
    %c0 = arith.constant 0 : index
    %c0_0 = arith.constant 0 : index
    %0 = vector.load %arg1[%c0, %c0_0] : memref<16x256xf32, #tpu.memory_space<vmem>>, vector<16x256xf32>
    %c0_1 = arith.constant 0 : index
    %c0_2 = arith.constant 0 : index
    %1 = vector.load %arg2[%c0_1, %c0_2] : memref<1x256xf32, #tpu.memory_space<vmem>>, vector<1x256xf32>
    %c0_3 = arith.constant 0 : index
    %c0_4 = arith.constant 0 : index
    %2 = vector.load %arg3[%c0_3, %c0_4] : memref<1x256xf32, #tpu.memory_space<vmem>>, vector<1x256xf32>
    %cst = arith.constant dense<0.000000e+00> : vector<256xf32>
    %3 = vector.multi_reduction <add>, %0, %cst [0] : vector<16x256xf32> to vector<256xf32>
    %4 = vector.shape_cast %3 : vector<256xf32> to vector<1x256xf32>
    %cst_5 = arith.constant 1.600000e+01 : f32
    %5 = vector.broadcast %cst_5 : f32 to vector<1x256xf32>
    %6 = arith.divf %4, %5 : vector<1x256xf32>
    %7 = vector.broadcast %6 : vector<1x256xf32> to vector<16x256xf32>
    %8 = arith.subf %0, %7 : vector<16x256xf32>
    %9 = arith.mulf %8, %8 : vector<16x256xf32>
    %cst_6 = arith.constant dense<0.000000e+00> : vector<256xf32>
    %10 = vector.multi_reduction <add>, %9, %cst_6 [0] : vector<16x256xf32> to vector<256xf32>
    %11 = vector.shape_cast %10 : vector<256xf32> to vector<1x256xf32>
    %cst_7 = arith.constant 1.600000e+01 : f32
    %12 = vector.broadcast %cst_7 : f32 to vector<1x256xf32>
    %13 = arith.divf %11, %12 : vector<1x256xf32>
    %cst_8 = arith.constant 8.000000e-01 : f32
    %14 = vector.broadcast %cst_8 : f32 to vector<1x256xf32>
    %15 = arith.addf %13, %14 : vector<1x256xf32>
    %16 = math.rsqrt %15 : vector<1x256xf32>
    %17 = arith.mulf %1, %16 : vector<1x256xf32>
    %18 = vector.broadcast %17 : vector<1x256xf32> to vector<16x256xf32>
    %19 = arith.mulf %8, %18 : vector<16x256xf32>
    %20 = vector.broadcast %2 : vector<1x256xf32> to vector<16x256xf32>
    %21 = arith.addf %19, %20 : vector<16x256xf32>
    %cst_9 = arith.constant 0.000000e+00 : f32
    %22 = vector.broadcast %cst_9 : f32 to vector<16x256xf32>
    %23 = arith.cmpf ogt, %21, %22 : vector<16x256xf32>
    %cst_10 = arith.constant 2.000000e-01 : f32
    %24 = vector.broadcast %cst_10 : f32 to vector<16x256xf32>
    %25 = arith.mulf %24, %21 : vector<16x256xf32>
    %26 = arith.select %23, %21, %25 : vector<16x256xi1>, vector<16x256xf32>
    %c0_11 = arith.constant 0 : index
    %c0_12 = arith.constant 0 : index
    %27 = vector.load %arg4[%c0_11, %c0_12] : memref<256x128xf32, #tpu.memory_space<vmem>>, vector<256x128xf32>
    %cst_13 = arith.constant dense<0.000000e+00> : vector<16x128xf32>
    %28 = tpu.matmul %26, %27, %cst_13 {dimension_numbers = #tpu.dot_dimension_numbers<[1], [0], [0], [1], [0, 0, 1, 1], [], []>} : vector<16x256xf32>, vector<256x128xf32>, vector<16x128xf32> -> vector<16x128xf32>
    %c0_14 = arith.constant 0 : index
    %c0_15 = arith.constant 0 : index
    %29 = vector.load %arg5[%c0_14, %c0_15] : memref<1x128xf32, #tpu.memory_space<vmem>>, vector<1x128xf32>
    %30 = vector.broadcast %29 : vector<1x128xf32> to vector<16x128xf32>
    %31 = arith.addf %28, %30 : vector<16x128xf32>
    %c0_16 = arith.constant 0 : index
    %c0_17 = arith.constant 0 : index
    %32 = vector.load %arg6[%c0_16, %c0_17] : memref<1x128xf32, #tpu.memory_space<vmem>>, vector<1x128xf32>
    %c0_18 = arith.constant 0 : index
    %c0_19 = arith.constant 0 : index
    %33 = vector.load %arg7[%c0_18, %c0_19] : memref<1x128xf32, #tpu.memory_space<vmem>>, vector<1x128xf32>
    %cst_20 = arith.constant dense<0.000000e+00> : vector<128xf32>
    %34 = vector.multi_reduction <add>, %31, %cst_20 [0] : vector<16x128xf32> to vector<128xf32>
    %35 = vector.shape_cast %34 : vector<128xf32> to vector<1x128xf32>
    %cst_21 = arith.constant 1.600000e+01 : f32
    %36 = vector.broadcast %cst_21 : f32 to vector<1x128xf32>
    %37 = arith.divf %35, %36 : vector<1x128xf32>
    %38 = vector.broadcast %37 : vector<1x128xf32> to vector<16x128xf32>
    %39 = arith.subf %31, %38 : vector<16x128xf32>
    %40 = arith.mulf %39, %39 : vector<16x128xf32>
    %cst_22 = arith.constant dense<0.000000e+00> : vector<128xf32>
    %41 = vector.multi_reduction <add>, %40, %cst_22 [0] : vector<16x128xf32> to vector<128xf32>
    %42 = vector.shape_cast %41 : vector<128xf32> to vector<1x128xf32>
    %cst_23 = arith.constant 1.600000e+01 : f32
    %43 = vector.broadcast %cst_23 : f32 to vector<1x128xf32>
    %44 = arith.divf %42, %43 : vector<1x128xf32>
    %cst_24 = arith.constant 8.000000e-01 : f32
    %45 = vector.broadcast %cst_24 : f32 to vector<1x128xf32>
    %46 = arith.addf %44, %45 : vector<1x128xf32>
    %47 = math.rsqrt %46 : vector<1x128xf32>
    %48 = arith.mulf %32, %47 : vector<1x128xf32>
    %49 = vector.broadcast %48 : vector<1x128xf32> to vector<16x128xf32>
    %50 = arith.mulf %39, %49 : vector<16x128xf32>
    %51 = vector.broadcast %33 : vector<1x128xf32> to vector<16x128xf32>
    %52 = arith.addf %50, %51 : vector<16x128xf32>
    %cst_25 = arith.constant 0.000000e+00 : f32
    %53 = vector.broadcast %cst_25 : f32 to vector<16x128xf32>
    %54 = arith.cmpf ogt, %52, %53 : vector<16x128xf32>
    %cst_26 = arith.constant 2.000000e-01 : f32
    %55 = vector.broadcast %cst_26 : f32 to vector<16x128xf32>
    %56 = arith.mulf %55, %52 : vector<16x128xf32>
    %57 = arith.select %54, %52, %56 : vector<16x128xi1>, vector<16x128xf32>
    %c0_27 = arith.constant 0 : index
    %c0_28 = arith.constant 0 : index
    %58 = vector.load %arg8[%c0_27, %c0_28] : memref<1x128xf32, #tpu.memory_space<vmem>>, vector<1x128xf32>
    %59 = vector.broadcast %58 : vector<1x128xf32> to vector<16x128xf32>
    %60 = arith.mulf %57, %59 : vector<16x128xf32>
    %cst_29 = arith.constant dense<0.000000e+00> : vector<16xf32>
    %61 = vector.multi_reduction <add>, %60, %cst_29 [1] : vector<16x128xf32> to vector<16xf32>
    %62 = vector.shape_cast %61 : vector<16xf32> to vector<16x1xf32>
    %c0_30 = arith.constant 0 : index
    %c0_31 = arith.constant 0 : index
    %63 = vector.load %arg9[%c0_30, %c0_31] : memref<1x1xf32, #tpu.memory_space<vmem>>, vector<1x1xf32>
    %64 = vector.broadcast %63 : vector<1x1xf32> to vector<16x1xf32>
    %65 = arith.addf %62, %64 : vector<16x1xf32>
    %66 = arith.negf %65 : vector<16x1xf32>
    %67 = math.exp %66 : vector<16x1xf32>
    %cst_32 = arith.constant 1.000000e+00 : f32
    %68 = vector.broadcast %cst_32 : f32 to vector<16x1xf32>
    %69 = arith.addf %68, %67 : vector<16x1xf32>
    %70 = arith.divf %68, %69 : vector<16x1xf32>
    %c0_33 = arith.constant 0 : index
    %c0_34 = arith.constant 0 : index
    %71 = vector.load %arg10[%c0_33, %c0_34] : memref<16x1xf32, #tpu.memory_space<vmem>>, vector<16x1xf32>
    tpu.vector_store %arg10[%c0_33, %c0_34], %70 {strides = array<i32>} : memref<16x1xf32, #tpu.memory_space<vmem>>, vector<16x1xf32>,
    return
  }
  func.func @transform_0(%arg0: i32) -> (i32, i32) {
    %c0_i32 = arith.constant 0 : i32
    %c0_i32_0 = arith.constant 0 : i32
    %c0_i32_1 = arith.constant 0 : i32
    return %c0_i32, %c0_i32_0 : i32, i32
  }
  func.func @transform_1(%arg0: i32) -> (i32, i32) {
    %c0_i32 = arith.constant 0 : i32
    %c0_i32_0 = arith.constant 0 : i32
    %c0_i32_1 = arith.constant 0 : i32
    return %c0_i32, %c0_i32_0 : i32, i32
  }
  func.func @transform_2(%arg0: i32) -> (i32, i32) {
    %c0_i32 = arith.constant 0 : i32
    %c0_i32_0 = arith.constant 0 : i32
    %c0_i32_1 = arith.constant 0 : i32
    return %c0_i32, %c0_i32_0 : i32, i32
  }
  func.func @transform_3(%arg0: i32) -> (i32, i32) {
    %c0_i32 = arith.constant 0 : i32
    %c0_i32_0 = arith.constant 0 : i32
    %c0_i32_1 = arith.constant 0 : i32
    return %c0_i32, %c0_i32_0 : i32, i32
  }
  func.func @transform_4(%arg0: i32) -> (i32, i32) {
    %c0_i32 = arith.constant 0 : i32
    %c0_i32_0 = arith.constant 0 : i32
    %c0_i32_1 = arith.constant 0 : i32
    return %c0_i32, %c0_i32_0 : i32, i32
  }
  func.func @transform_5(%arg0: i32) -> (i32, i32) {
    %c0_i32 = arith.constant 0 : i32
    %c0_i32_0 = arith.constant 0 : i32
    %c0_i32_1 = arith.constant 0 : i32
    return %c0_i32, %c0_i32_0 : i32, i32
  }
  func.func @transform_6(%arg0: i32) -> (i32, i32) {
    %c0_i32 = arith.constant 0 : i32
    %c0_i32_0 = arith.constant 0 : i32
    %c0_i32_1 = arith.constant 0 : i32
    return %c0_i32, %c0_i32_0 : i32, i32
  }
  func.func @transform_7(%arg0: i32) -> (i32, i32) {
    %c0_i32 = arith.constant 0 : i32
    %c0_i32_0 = arith.constant 0 : i32
    %c0_i32_1 = arith.constant 0 : i32
    return %c0_i32, %c0_i32_0 : i32, i32
  }
  func.func @transform_8(%arg0: i32) -> (i32, i32) {
    %c0_i32 = arith.constant 0 : i32
    %c0_i32_0 = arith.constant 0 : i32
    %c0_i32_1 = arith.constant 0 : i32
    return %c0_i32, %c0_i32_0 : i32, i32
  }
  func.func @transform_9(%arg0: i32) -> (i32, i32) {
    %c0_i32 = arith.constant 0 : i32
    %c0_i32_0 = arith.constant 0 : i32
    %c0_i32_1 = arith.constant 0 : i32
    return %c0_i32, %c0_i32_0 : i32, i32
  }
}

</mosaic_0001>

<llo_original>
// kernel: tpu_custom_call.1
$region0: #{tpu_custom_call.1}
  #allocation0 [shape = 'u32[]', space=smem, size = 0x4, offset = 0x4, fixed_abs, tag = 'smem constant byte address 0x4 - core index']
  #allocation1 [shape = 'u32[144,128]{1,0:T(1,128)}', space=vmem, size = 0x12000, scoped, tag = 'internal scratch']
  #allocation2 [shape = 'f32[1,1]{1,0:T(1,128)S(1)}', space=vmem, size = 0x200, scoped, tag = 'scoped memory for tpu_custom_call.1']
  %s0 = inlined_call_operand.hbm [shape: f32[16,256], index: 0, kind: input, shape index: {}]
  %s1 = inlined_call_operand.vmem [shape: f32[1,256], index: 1, kind: input, shape index: {}]
  %s2 = inlined_call_operand.vmem [shape: f32[1,256], index: 2, kind: input, shape index: {}]
  %s3 = inlined_call_operand.hbm [shape: f32[256,128], index: 3, kind: input, shape index: {}]
  %s4 = inlined_call_operand.vmem [shape: f32[1,128], index: 4, kind: input, shape index: {}]
  %s5 = inlined_call_operand.vmem [shape: f32[1,128], index: 5, kind: input, shape index: {}]
  %s6 = inlined_call_operand.vmem [shape: f32[1,128], index: 6, kind: input, shape index: {}]
  %s7 = inlined_call_operand.vmem [shape: f32[1,128], index: 7, kind: input, shape index: {}]
  %s8 = inlined_call_operand.<no memory space> [shape: f32[1,1], index: 8, kind: input, shape index: {}]
  %s9 = inlined_call_operand.vmem [shape: f32[16,1], index: 9, kind: output, shape index: {}]
  %s10 = sld [smem:[#allocation0]]
  $region54: #{tpu_custom_call.1} parent=0
    _
  %s12 = ssub.s32 1, %s10
  %s13 = scalar_select 0, %s12, %s10
  %v14 = vstv %s8
  %15 = vst [vmem:[#allocation2] sm:$0x1] %v14
  $region1: #{tpu_custom_call.1} parent=0
    #allocation3 [shape = 'u8[16384]{0}', space=vmem, size = 0x4000, scoped, tag = 'input window, operand 0, single buffered']
    #allocation4 [shape = 's32[1]{0}', space=sflag, size = 0x4, scoped, tag = 'scoped memory for tpu_custom_call.1']
    #allocation5 [shape = 'u8[131072]{0}', space=vmem, size = 0x20000, scoped, tag = 'input window, operand 3, single buffered']
    #allocation6 [shape = 's32[1]{0}', space=sflag, size = 0x4, scoped, tag = 'scoped memory for tpu_custom_call.1']
    %16 = vsyncpa [#allocation4], 0
    %17 = vsyncpa [#allocation6], 0
    // Predicated region
    $region2: #{tpu_custom_call.1} parent=1 // pred_check
      _
    $region3: #{tpu_custom_call.1} parent=1 // pred_check_branch
      %19 = sbr.rel (0) target = $region5
    $region4: #{tpu_custom_call.1} parent=1 // pred_region
      %s21 = ssub.s32 512, 512
      %22 = vsyncadd [#allocation4], %s21
      %s23 = sshll.u32 [#allocation3], 4
      %s24 = int_to_ptr.vmem [resolvable:$true] %s23
      %29 = dma.hbm_to_vmem [thread:$0]  %s0, 512, %s24, [#allocation4], 256, 256, 16
    $region5: #{tpu_custom_call.1} parent=1 // pred_fallthru
      _
    // Predicated region
    $region6: #{tpu_custom_call.1} parent=1 // pred_check
      _
    $region7: #{tpu_custom_call.1} parent=1 // pred_check_branch
      %31 = sbr.rel (0) target = $region9
    $region8: #{tpu_custom_call.1} parent=1 // pred_region
      _
    $region9: #{tpu_custom_call.1} parent=1 // pred_fallthru
      _
    // Predicated region
    $region10: #{tpu_custom_call.1} parent=1 // pred_check
      _
    $region11: #{tpu_custom_call.1} parent=1 // pred_check_branch
      %33 = sbr.rel (0) target = $region13
    $region12: #{tpu_custom_call.1} parent=1 // pred_region
      _
    $region13: #{tpu_custom_call.1} parent=1 // pred_fallthru
      _
    // Predicated region
    $region14: #{tpu_custom_call.1} parent=1 // pred_check
      _
    $region15: #{tpu_custom_call.1} parent=1 // pred_check_branch
      %35 = sbr.rel (0) target = $region17
    $region16: #{tpu_custom_call.1} parent=1 // pred_region
      %s37 = ssub.s32 4096, 4096
      %38 = vsyncadd [#allocation6], %s37
      %s39 = sshll.u32 [#allocation5], 4
      %s40 = int_to_ptr.vmem [resolvable:$true] %s39
      %45 = dma.hbm_to_vmem [thread:$0]  %s3, 4096, %s40, [#allocation6], 128, 128, 8
    $region17: #{tpu_custom_call.1} parent=1 // pred_fallthru
      _
    // Predicated region
    $region18: #{tpu_custom_call.1} parent=1 // pred_check
      _
    $region19: #{tpu_custom_call.1} parent=1 // pred_check_branch
      %47 = sbr.rel (0) target = $region21
    $region20: #{tpu_custom_call.1} parent=1 // pred_region
      _
    $region21: #{tpu_custom_call.1} parent=1 // pred_fallthru
      _
    // Predicated region
    $region22: #{tpu_custom_call.1} parent=1 // pred_check
      _
    $region23: #{tpu_custom_call.1} parent=1 // pred_check_branch
      %49 = sbr.rel (0) target = $region25
    $region24: #{tpu_custom_call.1} parent=1 // pred_region
      _
    $region25: #{tpu_custom_call.1} parent=1 // pred_fallthru
      _
    // Predicated region
    $region26: #{tpu_custom_call.1} parent=1 // pred_check
      _
    $region27: #{tpu_custom_call.1} parent=1 // pred_check_branch
      %51 = sbr.rel (0) target = $region29
    $region28: #{tpu_custom_call.1} parent=1 // pred_region
      _
    $region29: #{tpu_custom_call.1} parent=1 // pred_fallthru
      _
    // Predicated region
    $region30: #{tpu_custom_call.1} parent=1 // pred_check
      _
    $region31: #{tpu_custom_call.1} parent=1 // pred_check_branch
      %53 = sbr.rel (0) target = $region33
    $region32: #{tpu_custom_call.1} parent=1 // pred_region
      _
    $region33: #{tpu_custom_call.1} parent=1 // pred_fallthru
      _
    // Predicated region
    $region34: #{tpu_custom_call.1} parent=1 // pred_check
      _
    $region35: #{tpu_custom_call.1} parent=1 // pred_check_branch
      %55 = sbr.rel (0) target = $region37
    $region36: #{tpu_custom_call.1} parent=1 // pred_region
      _
    $region37: #{tpu_custom_call.1} parent=1 // pred_fallthru
      _
    // Predicated region
    $region38: #{tpu_custom_call.1} parent=1 // pred_check
      _
    $region39: #{tpu_custom_call.1} parent=1 // pred_check_branch
      %57 = sbr.rel (0) target = $region41
    $region40: #{tpu_custom_call.1} parent=1 // pred_region
      %58 = dma.done [#allocation4], 512
    $region41: #{tpu_custom_call.1} parent=1 // pred_fallthru
      _
    // Predicated region
    $region42: #{tpu_custom_call.1} parent=1 // pred_check
      _
    $region43: #{tpu_custom_call.1} parent=1 // pred_check_branch
      %60 = sbr.rel (0) target = $region45
    $region44: #{tpu_custom_call.1} parent=1 // pred_region
      %61 = dma.done [#allocation6], 4096
    $region45: #{tpu_custom_call.1} parent=1 // pred_fallthru
      _
    %v62 = vld [vmem:[#allocation3] sm:$0xff]
    %v63 = vld [vmem:[#allocation3 + $0x8] sm:$0xff]
    %v64 = vld [vmem:[#allocation3 + $0x10] sm:$0xff]
    %v65 = vld [vmem:[#allocation3 + $0x18] sm:$0xff]
    %v66 = vld [vmem:[%s1] sm:$0x3]
    %v67 = vld [vmem:[%s2] sm:$0x3]
    %v68 = vadd.f32 %v62, %v64
    %v69 = vrot.slane %v68, 4
    %v70 = vadd.f32 %v68, %v69
    %v71 = vrot.slane %v70, 2
    %v72 = vadd.f32 %v70, %v71
    %v73 = vrot.slane %v72, 1
    %v74 = vadd.f32 %v72, %v73
    %v75 = vadd.f32 %v63, %v65
    %v76 = vrot.slane %v75, 4
    %v77 = vadd.f32 %v75, %v76
    %v78 = vrot.slane %v77, 2
    %v79 = vadd.f32 %v77, %v78
    %v80 = vrot.slane %v79, 1
    %v81 = vadd.f32 %v79, %v80
    %v82 = vrcp.pop 16.0
    %v83 = vmul.f32 %v74, %v82
    %v84 = vmul.f32 %v81, %v82
    %v85 = vsub.f32 %v62, %v83
    %v86 = vsub.f32 %v63, %v84
    %v87 = vsub.f32 %v64, %v83
    %v88 = vsub.f32 %v65, %v84
    %v89 = vmul.f32 %v85, %v85
    %v90 = vmul.f32 %v86, %v86
    %v91 = vmul.f32 %v87, %v87
    %v92 = vmul.f32 %v88, %v88
    %v93 = vadd.f32 %v89, %v91
    %v94 = vrot.slane %v93, 4
    %v95 = vadd.f32 %v93, %v94
    %v96 = vrot.slane %v95, 2
    %v97 = vadd.f32 %v95, %v96
    %v98 = vrot.slane %v97, 1
    %v99 = vadd.f32 %v97, %v98
    %v100 = vadd.f32 %v90, %v92
    %v101 = vrot.slane %v100, 4
    %v102 = vadd.f32 %v100, %v101
    %v103 = vrot.slane %v102, 2
    %v104 = vadd.f32 %v102, %v103
    %v105 = vrot.slane %v104, 1
    %v106 = vadd.f32 %v104, %v105
    %v107 = vmul.f32 %v99, %v82
    %v108 = vmul.f32 %v106, %v82
    %v109 = vadd.f32 %v107, 0.8
    %v110 = vadd.f32 %v108, 0.8
    %v111 = vrsqrt.pop %v109
    %v112 = vrsqrt.pop %v110
    %v115 = vcombine.low %v111, %v112
    %v117 = vunpack.c.l.s4 1966171168
    %v118 = vunpack.c.0.s8 %v117
    %v119 = vlaneseq
    %v120 = vshrl.u32 %v119, 7
    %v121 = vsub.s32 %v118, %v120
    %v122 = vrot.slane %v115, %v121
    %v124 = vunpack.c.l.s4 1966171168
    %v125 = vunpack.c.0.s8 %v124
    %v126 = vlaneseq
    %v127 = vshrl.u32 %v126, 7
    %v128 = vsub.s32 %v125, %v127
    %v129 = vrot.slane %v122, %v128
    %v131 = vmul.f32 %v66, %v129
    %v133 = vlaneseq
    %v134 = vshrl.u32 %v133, 7
    %v135 = vsub.s32 0, %v134
    %v136 = vrot.slane %v131, %v135
    %v137 = vlaneseq
    %v138 = vshrl.u32 %v137, 7
    %v139 = vsub.s32 1, %v138
    %v140 = vrot.slane %v131, %v139
    %v143 = vmul.f32 %v85, %v136
    %v144 = vmul.f32 %v86, %v140
    %v145 = vmul.f32 %v87, %v136
    %v146 = vmul.f32 %v88, %v140
    %v148 = vlaneseq
    %v149 = vshrl.u32 %v148, 7
    %v150 = vsub.s32 0, %v149
    %v151 = vrot.slane %v67, %v150
    %v152 = vlaneseq
    %v153 = vshrl.u32 %v152, 7
    %v154 = vsub.s32 1, %v153
    %v155 = vrot.slane %v67, %v154
    %v158 = vadd.f32 %v143, %v151
    %v159 = vadd.f32 %v144, %v155
    %v160 = vadd.f32 %v145, %v151
    %v161 = vadd.f32 %v146, %v155
    %vm162 = vcmp.gt.f32.partialorder %v158, 0.0
    %vm163 = vcmp.gt.f32.partialorder %v159, 0.0
    %vm164 = vcmp.gt.f32.partialorder %v160, 0.0
    %vm165 = vcmp.gt.f32.partialorder %v161, 0.0
    %v166 = vmul.f32 %v158, 0.2
    %v167 = vmul.f32 %v159, 0.2
    %v168 = vmul.f32 %v160, 0.2
    %v169 = vmul.f32 %v161, 0.2
    %v170 = vsel %vm162, %v158, %v166
    %v171 = vsel %vm163, %v159, %v167
    %v172 = vsel %vm164, %v160, %v168
    %v173 = vsel %vm165, %v161, %v169
    %v174 = vld [vmem:[#allocation5] sm:$0xff]
    %v175 = vld [vmem:[#allocation5 + $0x8] sm:$0xff]
    %v176 = vld [vmem:[#allocation5 + $0x10] sm:$0xff]
    %v177 = vld [vmem:[#allocation5 + $0x18] sm:$0xff]
    %v178 = vld [vmem:[#allocation5 + $0x20] sm:$0xff]
    %v179 = vld [vmem:[#allocation5 + $0x28] sm:$0xff]
    %v180 = vld [vmem:[#allocation5 + $0x30] sm:$0xff]
    %v181 = vld [vmem:[#allocation5 + $0x38] sm:$0xff]
    %v182 = vld [vmem:[#allocation5 + $0x40] sm:$0xff]
    %v183 = vld [vmem:[#allocation5 + $0x48] sm:$0xff]
    %v184 = vld [vmem:[#allocation5 + $0x50] sm:$0xff]
    %v185 = vld [vmem:[#allocation5 + $0x58] sm:$0xff]
    %v186 = vld [vmem:[#allocation5 + $0x60] sm:$0xff]
    %v187 = vld [vmem:[#allocation5 + $0x68] sm:$0xff]
    %v188 = vld [vmem:[#allocation5 + $0x70] sm:$0xff]
    %v189 = vld [vmem:[#allocation5 + $0x78] sm:$0xff]
    %v190 = vld [vmem:[#allocation5 + $0x80] sm:$0xff]
    %v191 = vld [vmem:[#allocation5 + $0x88] sm:$0xff]
    %v192 = vld [vmem:[#allocation5 + $0x90] sm:$0xff]
    %v193 = vld [vmem:[#allocation5 + $0x98] sm:$0xff]
    %v194 = vld [vmem:[#allocation5 + $0xa0] sm:$0xff]
    %v195 = vld [vmem:[#allocation5 + $0xa8] sm:$0xff]
    %v196 = vld [vmem:[#allocation5 + $0xb0] sm:$0xff]
    %v197 = vld [vmem:[#allocation5 + $0xb8] sm:$0xff]
    %v198 = vld [vmem:[#allocation5 + $0xc0] sm:$0xff]
    %v199 = vld [vmem:[#allocation5 + $0xc8] sm:$0xff]
    %v200 = vld [vmem:[#allocation5 + $0xd0] sm:$0xff]
    %v201 = vld [vmem:[#allocation5 + $0xd8] sm:$0xff]
    %v202 = vld [vmem:[#allocation5 + $0xe0] sm:$0xff]
    %v203 = vld [vmem:[#allocation5 + $0xe8] sm:$0xff]
    %v204 = vld [vmem:[#allocation5 + $0xf0] sm:$0xff]
    %v205 = vld [vmem:[#allocation5 + $0xf8] sm:$0xff]
    %v206 = vld [vmem:[%s4] sm:$0x1]
    %v208 = vlaneseq
    %v209 = vshrl.u32 %v208, 7
    %v210 = vsub.s32 0, %v209
    %v211 = vrot.slane %v206, %v210
    %213 = vmatprep.subr.mxu0 0.0
    %214 = vmatpush1.msra.mxu0 %v174
    %215 = vmatprep.subr.mxu0 0.0
    %216 = vmatpush1.msra.mxu0 %v175
    %217 = vmatprep.subr.mxu0 0.0
    %218 = vmatpush1.msra.mxu0 %v176
    %219 = vmatprep.subr.mxu0 0.0
    %220 = vmatpush1.msra.mxu0 %v177
    %221 = vmatprep.subr.mxu0 0.0
    %222 = vmatpush1.msra.mxu0 %v178
    %223 = vmatprep.subr.mxu0 0.0
    %224 = vmatpush1.msra.mxu0 %v179
    %225 = vmatprep.subr.mxu0 0.0
    %226 = vmatpush1.msra.mxu0 %v180
    %227 = vmatprep.subr.mxu0 0.0
    %228 = vmatpush1.msra.mxu0 %v181
    %229 = vmatprep.subr.mxu0 0.0
    %230 = vmatpush1.msra.mxu0 %v182
    %231 = vmatprep.subr.mxu0 0.0
    %232 = vmatpush1.msra.mxu0 %v183
    %233 = vmatprep.subr.mxu0 0.0
    %234 = vmatpush1.msra.mxu0 %v184
    %235 = vmatprep.subr.mxu0 0.0
    %236 = vmatpush1.msra.mxu0 %v185
    %237 = vmatprep.subr.mxu0 0.0
    %238 = vmatpush1.msra.mxu0 %v186
    %239 = vmatprep.subr.mxu0 0.0
    %240 = vmatpush1.msra.mxu0 %v187
    %241 = vmatprep.subr.mxu0 0.0
    %242 = vmatpush1.msra.mxu0 %v188
    %243 = vmatprep.subr.mxu0 0.0
    %244 = vmatpush1.msra.mxu0 %v189
    %245 = vmatprep.subr.mxu0 0.0
    %246 = vmatpush1.msra.mxu0 %v190
    %247 = vmatprep.subr.mxu0 0.0
    %248 = vmatpush1.msra.mxu0 %v191
    %249 = vmatprep.subr.mxu0 0.0
    %250 = vmatpush1.msra.mxu0 %v192
    %251 = vmatprep.subr.mxu0 0.0
    %252 = vmatpush1.msra.mxu0 %v193
    %253 = vmatprep.subr.mxu0 0.0
    %254 = vmatpush1.msra.mxu0 %v194
    %255 = vmatprep.subr.mxu0 0.0
    %256 = vmatpush1.msra.mxu0 %v195
    %257 = vmatprep.subr.mxu0 0.0
    %258 = vmatpush1.msra.mxu0 %v196
    %259 = vmatprep.subr.mxu0 0.0
    %260 = vmatpush1.msra.mxu0 %v197
    %261 = vmatprep.subr.mxu0 0.0
    %262 = vmatpush1.msra.mxu0 %v198
    %263 = vmatprep.subr.mxu0 0.0
    %264 = vmatpush1.msra.mxu0 %v199
    %265 = vmatprep.subr.mxu0 0.0
    %266 = vmatpush1.msra.mxu0 %v200
    %267 = vmatprep.subr.mxu0 0.0
    %268 = vmatpush1.msra.mxu0 %v201
    %269 = vmatprep.subr.mxu0 0.0
    %270 = vmatpush1.msra.mxu0 %v202
    %271 = vmatprep.subr.mxu0 0.0
    %272 = vmatpush1.msra.mxu0 %v203
    %273 = vmatprep.subr.mxu0 0.0
    %274 = vmatpush1.msra.mxu0 %v204
    %275 = vmatprep.subr.mxu0 0.0
    %276 = vmatpush1.msra.mxu0 %v205
    %277 = vmatprep.mubr.f32.mxu0 %v171
    %278 = vmatmul.mubr.f32.gmra.mrb[0].mxu0 %v170
    %v279 = vpop.f32.mrb[0].mxu0
    %v280 = vadd.f32 %v211, %v279
    %v281 = vpop.f32.mrb[0].mxu0
    %282 = vmatprep.mubr.f32.mxu0 %v173
    %283 = vmatmul.mubr.f32.gmra.mrb[0].mxu0 %v172
    %v284 = vpop.f32.mrb[0].mxu0
    %v285 = vadd.f32 %v211, %v284
    %v286 = vpop.f32.mrb[0].mxu0
    %287 = vdwg.mxu0
    %v288 = vld [vmem:[%s5] sm:$0x1]
    %v289 = vld [vmem:[%s6] sm:$0x1]
    %v290 = vadd.f32 %v280, %v285
    %v291 = vrot.slane %v290, 4
    %v292 = vadd.f32 %v290, %v291
    %v293 = vrot.slane %v292, 2
    %v294 = vadd.f32 %v292, %v293
    %v295 = vrot.slane %v294, 1
    %v296 = vadd.f32 %v294, %v295
    %v297 = vmul.f32 %v296, %v82
    %v298 = vsub.f32 %v280, %v297
    %v299 = vsub.f32 %v285, %v297
    %v300 = vmul.f32 %v298, %v298
    %v301 = vmul.f32 %v299, %v299
    %v302 = vadd.f32 %v300, %v301
    %v303 = vrot.slane %v302, 4
    %v304 = vadd.f32 %v302, %v303
    %v305 = vrot.slane %v304, 2
    %v306 = vadd.f32 %v304, %v305
    %v307 = vrot.slane %v306, 1
    %v308 = vadd.f32 %v306, %v307
    %v309 = vmul.f32 %v308, %v82
    %v310 = vadd.f32 %v309, 0.8
    %v311 = vrsqrt.pop %v310
    %v312 = vmul.f32 %v288, %v311
    %v314 = vlaneseq
    %v315 = vshrl.u32 %v314, 7
    %v316 = vsub.s32 0, %v315
    %v317 = vrot.slane %v312, %v316
    %v319 = vmul.f32 %v298, %v317
    %v320 = vmul.f32 %v299, %v317
    %v322 = vlaneseq
    %v323 = vshrl.u32 %v322, 7
    %v324 = vsub.s32 0, %v323
    %v325 = vrot.slane %v289, %v324
    %v327 = vadd.f32 %v319, %v325
    %v328 = vadd.f32 %v320, %v325
    %vm329 = vcmp.gt.f32.partialorder %v327, 0.0
    %vm330 = vcmp.gt.f32.partialorder %v328, 0.0
    %v331 = vmul.f32 %v327, 0.2
    %v332 = vmul.f32 %v328, 0.2
    %v333 = vsel %vm329, %v327, %v331
    %v334 = vsel %vm330, %v328, %v332
    %v335 = vld [vmem:[%s7] sm:$0x1]
    %v337 = vlaneseq
    %v338 = vshrl.u32 %v337, 7
    %v339 = vsub.s32 0, %v338
    %v340 = vrot.slane %v335, %v339
    %v342 = vmul.f32 %v333, %v340
    %v343 = vmul.f32 %v334, %v340
    %344 = vadd.xlane.f32.xlu0 %v342
    %v345 = vpop.xlane.xlu0 %344
    %346 = vadd.xlane.f32.xlu0 %v343
    %v347 = vpop.xlane.xlu0 %346
    %v348 = vld [vmem:[#allocation2] sm:$0x1]
    %v350 = vlaneseq
    %v351 = vshrl.u32 %v350, 7
    %v352 = vsub.s32 0, %v351
    %v353 = vrot.slane %v348, %v352
    %v355 = vadd.f32 %v345, %v353
    %v356 = vadd.f32 %v347, %v353
    %v357 = vxor.u32 %v355, 2147483648
    %v358 = vxor.u32 %v356, 2147483648
    %v359 = vmul.f32 %v357, 1.442695
    %v360 = vpow.pop %v359
    %v361 = vmul.f32 %v358, 1.442695
    %v362 = vpow.pop %v361
    %v363 = vadd.f32 %v360, 1.0
    %v364 = vadd.f32 %v362, 1.0
    %v365 = vrcp.pop %v363
    %v366 = vmul.f32 1.0, %v365
    %v367 = vrcp.pop %v364
    %v368 = vmul.f32 1.0, %v367
    %vm369 = vcmask 7168
    %370 = vst.msk [vmem:[%s9] sm:$0xff] %vm369, %v366
    %371 = vst.msk [vmem:[%s9 + $0x8] sm:$0xff] %vm369, %v368
    // Predicated region
    $region46: #{tpu_custom_call.1} parent=1 // pred_check
      _
    $region47: #{tpu_custom_call.1} parent=1 // pred_check_branch
      %373 = sbr.rel (0) target = $region49
    $region48: #{tpu_custom_call.1} parent=1 // pred_region
      _
    $region49: #{tpu_custom_call.1} parent=1 // pred_fallthru
      _
    // Predicated region
    $region50: #{tpu_custom_call.1} parent=1 // pred_check
      _
    $region51: #{tpu_custom_call.1} parent=1 // pred_check_branch
      %375 = sbr.rel (0) target = $region53
    $region52: #{tpu_custom_call.1} parent=1 // pred_region
      _
    $region53: #{tpu_custom_call.1} parent=1 // pred_fallthru
      _
    %376 = vsyncpa [#allocation4], 1
    %377 = vsyncpa [#allocation6], 1

</llo_original>
